<compile_context>
chip_gen: v7x
topology: tpu7x:2x2x1
jax: 0.10.0
libtpu: 0.0.40
codegen_flags: <defaults>
</compile_context>

<pallas_src>
import jax
import jax.numpy as jnp
from jax.experimental import pallas as pl
from jax.experimental.pallas import tpu as pltpu

LANE = 128


def decoder_kernel(z_ref, c_ref, w1z_ref, w1c_ref, b1_ref,
                   w2_ref, b2_ref, w3_ref, b3_ref, wf_ref, bf_ref, out_ref):
    """Fused MLP: bf16 MXU operands, f32 accumulation, f32 bias-add / ReLU."""
    zb = z_ref[...].astype(jnp.bfloat16)
    cb = c_ref[...].astype(jnp.bfloat16)
    # First Linear computed as z @ W1[:latent] + cond @ W1[latent:] (no concat).
    h = (jnp.dot(zb, w1z_ref[...], preferred_element_type=jnp.float32)
         + jnp.dot(cb, w1c_ref[...], preferred_element_type=jnp.float32)
         + b1_ref[...])
    h = jnp.maximum(h, 0.0)
    h = jnp.dot(h.astype(jnp.bfloat16), w2_ref[...],
                preferred_element_type=jnp.float32) + b2_ref[...]
    h = jnp.maximum(h, 0.0)
    h = jnp.dot(h.astype(jnp.bfloat16), w3_ref[...],
                preferred_element_type=jnp.float32) + b3_ref[...]
    h = jnp.maximum(h, 0.0)
    # nn.Dropout(0.5): identity in eval mode.
    # TODO(synk): training-mode dropout masking via pltpu.prng_* not implemented.
    out = jnp.dot(h.astype(jnp.bfloat16), wf_ref[...],
                  preferred_element_type=jnp.float32) + bf_ref[...]
    out_ref[...] = out.astype(out_ref.dtype)


def _round_up(x, m):
    return ((x + m - 1) // m) * m


def _pad2d(a, rows, cols):
    r, c = a.shape
    return jnp.pad(a, ((0, rows - r), (0, cols - c)))


def init_params(key, latent_dim, conditional_dim, output_dim, hidden_dims):
    """Returns (kernel_params, raw_params).

    raw_params match the PyTorch module (f32, weights stored as [in, out]).
    kernel_params: hidden feature axes zero-padded to multiples of 128 lanes
    (exact through Linear+ReLU), weights cast to bf16, W1 split into its
    z-rows / condition-rows.  The output axis is NOT padded (true-width store).
    """
    assert len(hidden_dims) == 3, "this fused kernel assumes 3 hidden layers"
    adjusted = latent_dim + conditional_dim
    dims = [adjusted] + list(hidden_dims)
    keys = jax.random.split(key, 2 * (len(hidden_dims) + 1))
    ki = 0
    raw = {}
    for i, (din, dout) in enumerate(zip(dims[:-1], dims[1:]), start=1):
        s = 1.0 / jnp.sqrt(din)
        raw[f"w{i}"] = jax.random.uniform(keys[ki], (din, dout), jnp.float32, -s, s); ki += 1
        raw[f"b{i}"] = jax.random.uniform(keys[ki], (1, dout), jnp.float32, -s, s); ki += 1
    din = hidden_dims[-1]
    s = 1.0 / jnp.sqrt(din)
    raw["wf"] = jax.random.uniform(keys[ki], (din, output_dim), jnp.float32, -s, s); ki += 1
    raw["bf"] = jax.random.uniform(keys[ki], (1, output_dim), jnp.float32, -s, s); ki += 1

    H = [_round_up(h, LANE) for h in hidden_dims]

    kp = {}
    w1 = raw["w1"]
    kp["w1z"] = _pad2d(w1[:latent_dim, :], latent_dim, H[0]).astype(jnp.bfloat16)
    kp["w1c"] = _pad2d(w1[latent_dim:, :], conditional_dim, H[0]).astype(jnp.bfloat16)
    kp["b1"] = _pad2d(raw["b1"], 1, H[0])                       # f32
    kp["w2"] = _pad2d(raw["w2"], H[0], H[1]).astype(jnp.bfloat16)
    kp["b2"] = _pad2d(raw["b2"], 1, H[1])
    kp["w3"] = _pad2d(raw["w3"], H[1], H[2]).astype(jnp.bfloat16)
    kp["b3"] = _pad2d(raw["b3"], 1, H[2])
    kp["wf"] = _pad2d(raw["wf"], H[2], output_dim).astype(jnp.bfloat16)  # true output width
    kp["bf"] = raw["bf"]                                                 # (1, output_dim), f32
    return kp, raw


def decoder_forward(z, condition, params, *, block_batch=None):
    """Batch-tiled fused decoder forward. Weights stay VMEM-resident across tiles."""
    B, latent_dim = z.shape
    cond_dim = condition.shape[1]
    out_dim = params["bf"].shape[-1]

    if block_batch is None:
        # Big enough to hide the ~0.35 us/step grid overhead, small enough to fit
        # comfortably in scoped VMEM (explicit limit set below).
        block_batch = min(_round_up(B, 8), 2048)
        # Keep >=2 grid steps for large batches so v7x's 2 TensorCores both work.
        if B > 512 and pl.cdiv(B, block_batch) < 2:
            block_batch = _round_up(pl.cdiv(B, 2), 8)
    tb = block_batch
    grid = (pl.cdiv(B, tb),)
    # Note: if B % tb != 0 the tail step computes on padded garbage rows, but
    # Pallas clips the out-of-bounds part of the output store -> still correct.

    args = (z, condition,
            params["w1z"], params["w1c"], params["b1"],
            params["w2"], params["b2"],
            params["w3"], params["b3"],
            params["wf"], params["bf"])

    def batch_map(i):
        return (i, 0)

    def const_map(i):          # weights/biases: same block every step -> VMEM-resident
        return (0, 0)

    in_specs = [
        pl.BlockSpec((tb, latent_dim), batch_map),
        pl.BlockSpec((tb, cond_dim), batch_map),
    ] + [pl.BlockSpec(tuple(a.shape), const_map) for a in args[2:]]
    out_spec = pl.BlockSpec((tb, out_dim), batch_map)

    h1 = params["w1z"].shape[1]
    h2 = params["w2"].shape[1]
    h3 = params["w3"].shape[1]
    weight_bytes = sum(int(a.size) * a.dtype.itemsize for a in args[2:])
    flops = 2 * B * ((latent_dim + cond_dim) * h1 + h1 * h2 + h2 * h3 + h3 * out_dim)
    bytes_accessed = int(4 * (z.size + condition.size + B * out_dim) + weight_bytes)

    # Explicit scoped-VMEM limit: keeps large tiles compiling on v5e (16 MiB default)
    # while staying well under v7x's 64 MiB physical VMEM.
    h_max = max(h1, h2, h3)
    vmem_est = (2 * tb * (latent_dim + cond_dim) * 4   # double-buffered input blocks (f32)
                + 2 * tb * out_dim * 4                 # double-buffered output blocks (f32)
                + 2 * weight_bytes                     # weights/biases (conservative 2x)
                + 6 * tb * h_max * 4)                  # in-kernel f32 intermediates + headroom
    vmem_limit = int(min(max(vmem_est, 16 << 20), 48 << 20))

    return pl.pallas_call(
        decoder_kernel,
        out_shape=jax.ShapeDtypeStruct((B, out_dim), z.dtype),
        grid=grid,
        in_specs=in_specs,
        out_specs=out_spec,
        compiler_params=pltpu.CompilerParams(
            dimension_semantics=("parallel",),
            vmem_limit_bytes=vmem_limit),
        cost_estimate=pl.CostEstimate(flops=flops, transcendentals=0,
                                      bytes_accessed=bytes_accessed),
    )(*args)


def reference_forward(z, condition, raw):
    """Pure-JAX f32 reference (matches the PyTorch module in eval mode)."""
    h = jnp.concatenate([z, condition], axis=1)
    for i in (1, 2, 3):
        h = jnp.maximum(h @ raw[f"w{i}"] + raw[f"b{i}"], 0.0)
    return h @ raw["wf"] + raw["bf"]


def reference_forward_bf16(z, condition, kp):
    """Pure-JAX forward with the same bf16 kernel weights / f32 accumulation."""
    h = (jnp.dot(z.astype(jnp.bfloat16), kp["w1z"], preferred_element_type=jnp.float32)
         + jnp.dot(condition.astype(jnp.bfloat16), kp["w1c"],
                   preferred_element_type=jnp.float32) + kp["b1"])
    h = jnp.maximum(h, 0.0)
    h = jnp.dot(h.astype(jnp.bfloat16), kp["w2"], preferred_element_type=jnp.float32) + kp["b2"]
    h = jnp.maximum(h, 0.0)
    h = jnp.dot(h.astype(jnp.bfloat16), kp["w3"], preferred_element_type=jnp.float32) + kp["b3"]
    h = jnp.maximum(h, 0.0)
    return jnp.dot(h.astype(jnp.bfloat16), kp["wf"], preferred_element_type=jnp.float32) + kp["bf"]


if __name__ == "__main__":
    batch = 8
    latent_dim = 8
    conditional_dim = 4
    output_dim = 16
    hidden_dims = [32, 32, 32]

    key = jax.random.PRNGKey(0)
    kz, kc, kp_key = jax.random.split(key, 3)
    z = jax.random.normal(kz, (batch, latent_dim), jnp.float32)
    condition = jax.random.normal(kc, (batch, conditional_dim), jnp.float32)
    kparams, raw = init_params(kp_key, latent_dim, conditional_dim, output_dim, hidden_dims)

    out = decoder_forward(z, condition, kparams)
    out = jax.block_until_ready(out)
    assert out.shape == (batch, output_dim)

    # Tight check vs a pure-JAX forward using the identical bf16 weights.
    ref_bf16 = reference_forward_bf16(z, condition, kparams)
    assert jnp.allclose(out, ref_bf16, atol=1e-3, rtol=1e-3), "mismatch vs bf16 reference"

    # Loose check vs the f32 PyTorch-equivalent reference (bf16 weight rounding).
    ref_f32 = reference_forward(z, condition, raw)
    assert jnp.allclose(out, ref_f32, atol=5e-2, rtol=5e-2), "mismatch vs f32 reference"

    print("KERNEL_OK")
</pallas_src>

<mosaic_0001>
module attributes {stable_mosaic.version = 11 : i64} {
  func.func @decoder_kernel(%arg0: i32, %arg1: memref<8x8xf32, #tpu.memory_space<vmem>>, %arg2: memref<8x4xf32, #tpu.memory_space<vmem>>, %arg3: memref<8x128xbf16, #tpu.memory_space<vmem>>, %arg4: memref<4x128xbf16, #tpu.memory_space<vmem>>, %arg5: memref<1x128xf32, #tpu.memory_space<vmem>>, %arg6: memref<128x128xbf16, #tpu.memory_space<vmem>>, %arg7: memref<1x128xf32, #tpu.memory_space<vmem>>, %arg8: memref<128x128xbf16, #tpu.memory_space<vmem>>, %arg9: memref<1x128xf32, #tpu.memory_space<vmem>>, %arg10: memref<128x16xbf16, #tpu.memory_space<vmem>>, %arg11: memref<1x16xf32, #tpu.memory_space<vmem>>, %arg12: memref<8x16xf32, #tpu.memory_space<vmem>>) attributes {dimension_semantics = [#tpu.dimension_semantics<parallel>], iteration_bounds = array<i64: 1>, scalar_prefetch = 0 : i64, scratch_operands = 0 : i64, tpu.core_type = #tpu.core_type<tc>, window_params = [{transform_indices = @transform_0, window_bounds = array<i64: 8, 8>}, {transform_indices = @transform_1, window_bounds = array<i64: 8, 4>}, {pipeline_mode = #tpu.pipeline_mode<synchronous>, transform_indices = @transform_2, window_bounds = array<i64: 8, 128>}, {pipeline_mode = #tpu.pipeline_mode<synchronous>, transform_indices = @transform_3, window_bounds = array<i64: 4, 128>}, {pipeline_mode = #tpu.pipeline_mode<synchronous>, transform_indices = @transform_4, window_bounds = array<i64: 1, 128>}, {pipeline_mode = #tpu.pipeline_mode<synchronous>, transform_indices = @transform_5, window_bounds = array<i64: 128, 128>}, {pipeline_mode = #tpu.pipeline_mode<synchronous>, transform_indices = @transform_6, window_bounds = array<i64: 1, 128>}, {pipeline_mode = #tpu.pipeline_mode<synchronous>, transform_indices = @transform_7, window_bounds = array<i64: 128, 128>}, {pipeline_mode = #tpu.pipeline_mode<synchronous>, transform_indices = @transform_8, window_bounds = array<i64: 1, 128>}, {pipeline_mode = #tpu.pipeline_mode<synchronous>, transform_indices = @transform_9, window_bounds = array<i64: 128, 16>}, {pipeline_mode = #tpu.pipeline_mode<synchronous>, transform_indices = @transform_10, window_bounds = array<i64: 1, 16>}, {transform_indices = @transform_11, window_bounds = array<i64: 8, 16>}]} {
    %c0 = arith.constant 0 : index
    %c0_0 = arith.constant 0 : index
    %0 = vector.load %arg1[%c0, %c0_0] : memref<8x8xf32, #tpu.memory_space<vmem>>, vector<8x8xf32>
    %1 = arith.truncf %0 : vector<8x8xf32> to vector<8x8xbf16>
    %c0_1 = arith.constant 0 : index
    %c0_2 = arith.constant 0 : index
    %2 = vector.load %arg2[%c0_1, %c0_2] : memref<8x4xf32, #tpu.memory_space<vmem>>, vector<8x4xf32>
    %3 = arith.truncf %2 : vector<8x4xf32> to vector<8x4xbf16>
    %c0_3 = arith.constant 0 : index
    %c0_4 = arith.constant 0 : index
    %4 = vector.load %arg3[%c0_3, %c0_4] : memref<8x128xbf16, #tpu.memory_space<vmem>>, vector<8x128xbf16>
    %cst = arith.constant dense<0.000000e+00> : vector<8x128xf32>
    %5 = tpu.matmul %1, %4, %cst {dimension_numbers = #tpu.dot_dimension_numbers<[1], [0], [0], [1], [0, 0, 1, 1], [], []>} : vector<8x8xbf16>, vector<8x128xbf16>, vector<8x128xf32> -> vector<8x128xf32>
    %c0_5 = arith.constant 0 : index
    %c0_6 = arith.constant 0 : index
    %6 = vector.load %arg4[%c0_5, %c0_6] : memref<4x128xbf16, #tpu.memory_space<vmem>>, vector<4x128xbf16>
    %cst_7 = arith.constant dense<0.000000e+00> : vector<8x128xf32>
    %7 = tpu.matmul %3, %6, %cst_7 {dimension_numbers = #tpu.dot_dimension_numbers<[1], [0], [0], [1], [0, 0, 1, 1], [], []>} : vector<8x4xbf16>, vector<4x128xbf16>, vector<8x128xf32> -> vector<8x128xf32>
    %8 = arith.addf %5, %7 : vector<8x128xf32>
    %c0_8 = arith.constant 0 : index
    %c0_9 = arith.constant 0 : index
    %9 = vector.load %arg5[%c0_8, %c0_9] : memref<1x128xf32, #tpu.memory_space<vmem>>, vector<1x128xf32>
    %10 = vector.broadcast %9 : vector<1x128xf32> to vector<8x128xf32>
    %11 = arith.addf %8, %10 : vector<8x128xf32>
    %cst_10 = arith.constant 0.000000e+00 : f32
    %12 = vector.broadcast %cst_10 : f32 to vector<8x128xf32>
    %13 = arith.maximumf %11, %12 : vector<8x128xf32>
    %14 = arith.truncf %13 : vector<8x128xf32> to vector<8x128xbf16>
    %c0_11 = arith.constant 0 : index
    %c0_12 = arith.constant 0 : index
    %15 = vector.load %arg6[%c0_11, %c0_12] : memref<128x128xbf16, #tpu.memory_space<vmem>>, vector<128x128xbf16>
    %cst_13 = arith.constant dense<0.000000e+00> : vector<8x128xf32>
    %16 = tpu.matmul %14, %15, %cst_13 {dimension_numbers = #tpu.dot_dimension_numbers<[1], [0], [0], [1], [0, 0, 1, 1], [], []>} : vector<8x128xbf16>, vector<128x128xbf16>, vector<8x128xf32> -> vector<8x128xf32>
    %c0_14 = arith.constant 0 : index
    %c0_15 = arith.constant 0 : index
    %17 = vector.load %arg7[%c0_14, %c0_15] : memref<1x128xf32, #tpu.memory_space<vmem>>, vector<1x128xf32>
    %18 = vector.broadcast %17 : vector<1x128xf32> to vector<8x128xf32>
    %19 = arith.addf %16, %18 : vector<8x128xf32>
    %cst_16 = arith.constant 0.000000e+00 : f32
    %20 = vector.broadcast %cst_16 : f32 to vector<8x128xf32>
    %21 = arith.maximumf %19, %20 : vector<8x128xf32>
    %22 = arith.truncf %21 : vector<8x128xf32> to vector<8x128xbf16>
    %c0_17 = arith.constant 0 : index
    %c0_18 = arith.constant 0 : index
    %23 = vector.load %arg8[%c0_17, %c0_18] : memref<128x128xbf16, #tpu.memory_space<vmem>>, vector<128x128xbf16>
    %cst_19 = arith.constant dense<0.000000e+00> : vector<8x128xf32>
    %24 = tpu.matmul %22, %23, %cst_19 {dimension_numbers = #tpu.dot_dimension_numbers<[1], [0], [0], [1], [0, 0, 1, 1], [], []>} : vector<8x128xbf16>, vector<128x128xbf16>, vector<8x128xf32> -> vector<8x128xf32>
    %c0_20 = arith.constant 0 : index
    %c0_21 = arith.constant 0 : index
    %25 = vector.load %arg9[%c0_20, %c0_21] : memref<1x128xf32, #tpu.memory_space<vmem>>, vector<1x128xf32>
    %26 = vector.broadcast %25 : vector<1x128xf32> to vector<8x128xf32>
    %27 = arith.addf %24, %26 : vector<8x128xf32>
    %cst_22 = arith.constant 0.000000e+00 : f32
    %28 = vector.broadcast %cst_22 : f32 to vector<8x128xf32>
    %29 = arith.maximumf %27, %28 : vector<8x128xf32>
    %30 = arith.truncf %29 : vector<8x128xf32> to vector<8x128xbf16>
    %c0_23 = arith.constant 0 : index
    %c0_24 = arith.constant 0 : index
    %31 = vector.load %arg10[%c0_23, %c0_24] : memref<128x16xbf16, #tpu.memory_space<vmem>>, vector<128x16xbf16>
    %cst_25 = arith.constant dense<0.000000e+00> : vector<8x16xf32>
    %32 = tpu.matmul %30, %31, %cst_25 {dimension_numbers = #tpu.dot_dimension_numbers<[1], [0], [0], [1], [0, 0, 1, 1], [], []>} : vector<8x128xbf16>, vector<128x16xbf16>, vector<8x16xf32> -> vector<8x16xf32>
    %c0_26 = arith.constant 0 : index
    %c0_27 = arith.constant 0 : index
    %33 = vector.load %arg11[%c0_26, %c0_27] : memref<1x16xf32, #tpu.memory_space<vmem>>, vector<1x16xf32>
    %34 = vector.broadcast %33 : vector<1x16xf32> to vector<8x16xf32>
    %35 = arith.addf %32, %34 : vector<8x16xf32>
    %c0_28 = arith.constant 0 : index
    %c0_29 = arith.constant 0 : index
    %36 = vector.load %arg12[%c0_28, %c0_29] : memref<8x16xf32, #tpu.memory_space<vmem>>, vector<8x16xf32>
    tpu.vector_store %arg12[%c0_28, %c0_29], %35 {strides = array<i32>} : memref<8x16xf32, #tpu.memory_space<vmem>>, vector<8x16xf32>,
    return
  }
  func.func @transform_0(%arg0: i32) -> (i32, i32) {
    %c0_i32 = arith.constant 0 : i32
    %c0_i32_0 = arith.constant 0 : i32
    return %arg0, %c0_i32 : i32, i32
  }
  func.func @transform_1(%arg0: i32) -> (i32, i32) {
    %c0_i32 = arith.constant 0 : i32
    %c0_i32_0 = arith.constant 0 : i32
    return %arg0, %c0_i32 : i32, i32
  }
  func.func @transform_2(%arg0: i32) -> (i32, i32) {
    %c0_i32 = arith.constant 0 : i32
    %c0_i32_0 = arith.constant 0 : i32
    %c0_i32_1 = arith.constant 0 : i32
    return %c0_i32, %c0_i32_0 : i32, i32
  }
  func.func @transform_3(%arg0: i32) -> (i32, i32) {
    %c0_i32 = arith.constant 0 : i32
    %c0_i32_0 = arith.constant 0 : i32
    %c0_i32_1 = arith.constant 0 : i32
    return %c0_i32, %c0_i32_0 : i32, i32
  }
  func.func @transform_4(%arg0: i32) -> (i32, i32) {
    %c0_i32 = arith.constant 0 : i32
    %c0_i32_0 = arith.constant 0 : i32
    %c0_i32_1 = arith.constant 0 : i32
    return %c0_i32, %c0_i32_0 : i32, i32
  }
  func.func @transform_5(%arg0: i32) -> (i32, i32) {
    %c0_i32 = arith.constant 0 : i32
    %c0_i32_0 = arith.constant 0 : i32
    %c0_i32_1 = arith.constant 0 : i32
    return %c0_i32, %c0_i32_0 : i32, i32
  }
  func.func @transform_6(%arg0: i32) -> (i32, i32) {
    %c0_i32 = arith.constant 0 : i32
    %c0_i32_0 = arith.constant 0 : i32
    %c0_i32_1 = arith.constant 0 : i32
    return %c0_i32, %c0_i32_0 : i32, i32
  }
  func.func @transform_7(%arg0: i32) -> (i32, i32) {
    %c0_i32 = arith.constant 0 : i32
    %c0_i32_0 = arith.constant 0 : i32
    %c0_i32_1 = arith.constant 0 : i32
    return %c0_i32, %c0_i32_0 : i32, i32
  }
  func.func @transform_8(%arg0: i32) -> (i32, i32) {
    %c0_i32 = arith.constant 0 : i32
    %c0_i32_0 = arith.constant 0 : i32
    %c0_i32_1 = arith.constant 0 : i32
    return %c0_i32, %c0_i32_0 : i32, i32
  }
  func.func @transform_9(%arg0: i32) -> (i32, i32) {
    %c0_i32 = arith.constant 0 : i32
    %c0_i32_0 = arith.constant 0 : i32
    %c0_i32_1 = arith.constant 0 : i32
    return %c0_i32, %c0_i32_0 : i32, i32
  }
  func.func @transform_10(%arg0: i32) -> (i32, i32) {
    %c0_i32 = arith.constant 0 : i32
    %c0_i32_0 = arith.constant 0 : i32
    %c0_i32_1 = arith.constant 0 : i32
    return %c0_i32, %c0_i32_0 : i32, i32
  }
  func.func @transform_11(%arg0: i32) -> (i32, i32) {
    %c0_i32 = arith.constant 0 : i32
    %c0_i32_0 = arith.constant 0 : i32
    return %arg0, %c0_i32 : i32, i32
  }
}

</mosaic_0001>

<llo_original>
// kernel: tpu_custom_call.1
$region0: #{tpu_custom_call.1}
  #allocation0 [shape = 'u32[]', space=smem, size = 0x4, offset = 0x4, fixed_abs, tag = 'smem constant byte address 0x4 - core index']
  #allocation1 [shape = 'u32[144,128]{1,0:T(1,128)}', space=vmem, size = 0x12000, scoped, tag = 'internal scratch']
  %s0 = inlined_call_operand.vmem [shape: f32[8,8], index: 0, kind: input, shape index: {}]
  %s1 = inlined_call_operand.vmem [shape: f32[8,4], index: 1, kind: input, shape index: {}]
  %s2 = inlined_call_operand.vmem [shape: bf16[8,128], index: 2, kind: input, shape index: {}]
  %s3 = inlined_call_operand.vmem [shape: bf16[4,128], index: 3, kind: input, shape index: {}]
  %s4 = inlined_call_operand.vmem [shape: f32[1,128], index: 4, kind: input, shape index: {}]
  %s5 = inlined_call_operand.vmem [shape: bf16[128,128], index: 5, kind: input, shape index: {}]
  %s6 = inlined_call_operand.vmem [shape: f32[1,128], index: 6, kind: input, shape index: {}]
  %s7 = inlined_call_operand.hbm [shape: bf16[128,128], index: 7, kind: input, shape index: {}]
  %s8 = inlined_call_operand.vmem [shape: f32[1,128], index: 8, kind: input, shape index: {}]
  %s9 = inlined_call_operand.vmem [shape: bf16[128,16], index: 9, kind: input, shape index: {}]
  %s10 = inlined_call_operand.vmem [shape: f32[1,16], index: 10, kind: input, shape index: {}]
  %s11 = inlined_call_operand.hbm [shape: f32[8,16], index: 11, kind: output, shape index: {}]
  %s12 = sld [smem:[#allocation0]]
  $region58: #{tpu_custom_call.1} parent=0
    _
  %s14 = ssub.s32 1, %s12
  %s15 = scalar_select 0, %s14, %s12
  $region1: #{tpu_custom_call.1} parent=0
    #allocation2 [shape = 'u8[32768]{0}', space=vmem, size = 0x8000, scoped, tag = 'input window, operand 7, single buffered']
    #allocation3 [shape = 's32[1]{0}', space=sflag, size = 0x4, scoped, tag = 'scoped memory for tpu_custom_call.1']
    #allocation4 [shape = 's32[1]{0}', space=sflag, size = 0x4, scoped, tag = 'scoped memory for tpu_custom_call.1']
    #allocation5 [shape = 'u8[4096]{0}', space=vmem, size = 0x1000, scoped, tag = 'output window, operand 0, single buffered']
    %16 = vsyncpa [#allocation3], 0
    %17 = vsyncpa [#allocation4], 0
    // Predicated region
    $region2: #{tpu_custom_call.1} parent=1 // pred_check
      _
    $region3: #{tpu_custom_call.1} parent=1 // pred_check_branch
      %19 = sbr.rel (0) target = $region5
    $region4: #{tpu_custom_call.1} parent=1 // pred_region
      _
    $region5: #{tpu_custom_call.1} parent=1 // pred_fallthru
      _
    // Predicated region
    $region6: #{tpu_custom_call.1} parent=1 // pred_check
      _
    $region7: #{tpu_custom_call.1} parent=1 // pred_check_branch
      %21 = sbr.rel (0) target = $region9
    $region8: #{tpu_custom_call.1} parent=1 // pred_region
      _
    $region9: #{tpu_custom_call.1} parent=1 // pred_fallthru
      _
    // Predicated region
    $region10: #{tpu_custom_call.1} parent=1 // pred_check
      _
    $region11: #{tpu_custom_call.1} parent=1 // pred_check_branch
      %23 = sbr.rel (0) target = $region13
    $region12: #{tpu_custom_call.1} parent=1 // pred_region
      _
    $region13: #{tpu_custom_call.1} parent=1 // pred_fallthru
      _
    // Predicated region
    $region14: #{tpu_custom_call.1} parent=1 // pred_check
      _
    $region15: #{tpu_custom_call.1} parent=1 // pred_check_branch
      %25 = sbr.rel (0) target = $region17
    $region16: #{tpu_custom_call.1} parent=1 // pred_region
      _
    $region17: #{tpu_custom_call.1} parent=1 // pred_fallthru
      _
    // Predicated region
    $region18: #{tpu_custom_call.1} parent=1 // pred_check
      _
    $region19: #{tpu_custom_call.1} parent=1 // pred_check_branch
      %27 = sbr.rel (0) target = $region21
    $region20: #{tpu_custom_call.1} parent=1 // pred_region
      _
    $region21: #{tpu_custom_call.1} parent=1 // pred_fallthru
      _
    // Predicated region
    $region22: #{tpu_custom_call.1} parent=1 // pred_check
      _
    $region23: #{tpu_custom_call.1} parent=1 // pred_check_branch
      %29 = sbr.rel (0) target = $region25
    $region24: #{tpu_custom_call.1} parent=1 // pred_region
      _
    $region25: #{tpu_custom_call.1} parent=1 // pred_fallthru
      _
    // Predicated region
    $region26: #{tpu_custom_call.1} parent=1 // pred_check
      _
    $region27: #{tpu_custom_call.1} parent=1 // pred_check_branch
      %31 = sbr.rel (0) target = $region29
    $region28: #{tpu_custom_call.1} parent=1 // pred_region
      _
    $region29: #{tpu_custom_call.1} parent=1 // pred_fallthru
      _
    // Predicated region
    $region30: #{tpu_custom_call.1} parent=1 // pred_check
      _
    $region31: #{tpu_custom_call.1} parent=1 // pred_check_branch
      %33 = sbr.rel (0) target = $region33
    $region32: #{tpu_custom_call.1} parent=1 // pred_region
      %s35 = ssub.s32 1024, 1024
      %36 = vsyncadd [#allocation3], %s35
      %s37 = sshll.u32 [#allocation2], 4
      %s38 = int_to_ptr.vmem [resolvable:$true] %s37
      %43 = dma.hbm_to_vmem [thread:$0]  %s7, 1024, %s38, [#allocation3], 64, 64, 4
    $region33: #{tpu_custom_call.1} parent=1 // pred_fallthru
      _
    // Predicated region
    $region34: #{tpu_custom_call.1} parent=1 // pred_check
      _
    $region35: #{tpu_custom_call.1} parent=1 // pred_check_branch
      %45 = sbr.rel (0) target = $region37
    $region36: #{tpu_custom_call.1} parent=1 // pred_region
      _
    $region37: #{tpu_custom_call.1} parent=1 // pred_fallthru
      _
    // Predicated region
    $region38: #{tpu_custom_call.1} parent=1 // pred_check
      _
    $region39: #{tpu_custom_call.1} parent=1 // pred_check_branch
      %47 = sbr.rel (0) target = $region41
    $region40: #{tpu_custom_call.1} parent=1 // pred_region
      _
    $region41: #{tpu_custom_call.1} parent=1 // pred_fallthru
      _
    // Predicated region
    $region42: #{tpu_custom_call.1} parent=1 // pred_check
      _
    $region43: #{tpu_custom_call.1} parent=1 // pred_check_branch
      %49 = sbr.rel (0) target = $region45
    $region44: #{tpu_custom_call.1} parent=1 // pred_region
      _
    $region45: #{tpu_custom_call.1} parent=1 // pred_fallthru
      _
    // Predicated region
    $region46: #{tpu_custom_call.1} parent=1 // pred_check
      _
    $region47: #{tpu_custom_call.1} parent=1 // pred_check_branch
      %51 = sbr.rel (0) target = $region49
    $region48: #{tpu_custom_call.1} parent=1 // pred_region
      %52 = dma.done [#allocation3], 1024
    $region49: #{tpu_custom_call.1} parent=1 // pred_fallthru
      _
    %v54 = vld [vmem:[%s0] sm:$0xff]
    %v55 = vpack.c.bf16 %v54, %v54
    %v56 = vld [vmem:[%s1] sm:$0xff]
    %v57 = vpack.c.bf16 %v56, %v56
    %v58 = vld [vmem:[%s2] sm:$0xf]
    %v59 = vld [vmem:[%s3] sm:$0x3]
    %vm60 = vcmask 31744
    %v62 = vsel %vm60, %v57, 0
    %vm64 = vcmask 1041408
    %v66 = vsel %vm64, %v59, 0
    %68 = vmatprep.subr.bf16.mxu0 0
    %69 = vmatpush1.bf16.msra.mxu0 %v66
    %70 = vmatprep.subr.bf16.mxu0 0
    %71 = vmatpush1.bf16.msra.mxu0 0
    %72 = vmatprep.subr.bf16.mxu0 0
    %73 = vmatpush1.bf16.msra.mxu0 0
    %74 = vmatprep.subr.bf16.mxu0 0
    %75 = vmatpush1.bf16.msra.mxu0 0
    %76 = vmatprep.subr.bf16.mxu0 0
    %77 = vmatpush1.bf16.msra.mxu0 0
    %78 = vmatprep.subr.bf16.mxu0 0
    %79 = vmatpush1.bf16.msra.mxu0 0
    %80 = vmatprep.subr.bf16.mxu0 0
    %81 = vmatpush1.bf16.msra.mxu0 0
    %82 = vmatprep.subr.bf16.mxu0 0
    %83 = vmatpush1.bf16.msra.mxu0 0
    %84 = vmatprep.subr.bf16.mxu0 0
    %85 = vmatpush1.bf16.msra.mxu0 0
    %86 = vmatprep.subr.bf16.mxu0 0
    %87 = vmatpush1.bf16.msra.mxu0 0
    %88 = vmatprep.subr.bf16.mxu0 0
    %89 = vmatpush1.bf16.msra.mxu0 0
    %90 = vmatprep.subr.bf16.mxu0 0
    %91 = vmatpush1.bf16.msra.mxu0 0
    %92 = vmatprep.subr.bf16.mxu0 0
    %93 = vmatpush1.bf16.msra.mxu0 0
    %94 = vmatprep.subr.bf16.mxu0 0
    %95 = vmatpush1.bf16.msra.mxu0 0
    %96 = vmatprep.subr.bf16.mxu0 0
    %97 = vmatpush1.bf16.msra.mxu0 0
    %98 = vmatprep.subr.bf16.mxu0 0
    %99 = vmatpush1.bf16.msra.mxu0 0
    %100 = vmatprep.mubr.bf16.mxu0 0
    %101 = vmatmul.mubr.bf16.gmra.mrb[0].mxu0 %v62
    %v102 = vpop.f32.mrb[0].mxu0
    %v103 = vadd.f32 0.0, %v102
    %v104 = vpop.f32.mrb[0].mxu0
    %v105 = vpop.f32.mrb[0].mxu0
    %v106 = vpop.f32.mrb[0].mxu0
    %107 = vdwg.mxu0
    %vm108 = vcmask 64512
    %v110 = vsel %vm108, %v55, 0
    %vm112 = vcmask 1043456
    %v114 = vsel %vm112, %v58, 0
    %116 = vmatprep.subr.bf16.mxu0 0
    %117 = vmatpush1.bf16.msra.mxu0 %v114
    %118 = vmatprep.subr.bf16.mxu0 0
    %119 = vmatpush1.bf16.msra.mxu0 0
    %120 = vmatprep.subr.bf16.mxu0 0
    %121 = vmatpush1.bf16.msra.mxu0 0
    %122 = vmatprep.subr.bf16.mxu0 0
    %123 = vmatpush1.bf16.msra.mxu0 0
    %124 = vmatprep.subr.bf16.mxu0 0
    %125 = vmatpush1.bf16.msra.mxu0 0
    %126 = vmatprep.subr.bf16.mxu0 0
    %127 = vmatpush1.bf16.msra.mxu0 0
    %128 = vmatprep.subr.bf16.mxu0 0
    %129 = vmatpush1.bf16.msra.mxu0 0
    %130 = vmatprep.subr.bf16.mxu0 0
    %131 = vmatpush1.bf16.msra.mxu0 0
    %132 = vmatprep.subr.bf16.mxu0 0
    %133 = vmatpush1.bf16.msra.mxu0 0
    %134 = vmatprep.subr.bf16.mxu0 0
    %135 = vmatpush1.bf16.msra.mxu0 0
    %136 = vmatprep.subr.bf16.mxu0 0
    %137 = vmatpush1.bf16.msra.mxu0 0
    %138 = vmatprep.subr.bf16.mxu0 0
    %139 = vmatpush1.bf16.msra.mxu0 0
    %140 = vmatprep.subr.bf16.mxu0 0
    %141 = vmatpush1.bf16.msra.mxu0 0
    %142 = vmatprep.subr.bf16.mxu0 0
    %143 = vmatpush1.bf16.msra.mxu0 0
    %144 = vmatprep.subr.bf16.mxu0 0
    %145 = vmatpush1.bf16.msra.mxu0 0
    %146 = vmatprep.subr.bf16.mxu0 0
    %147 = vmatpush1.bf16.msra.mxu0 0
    %148 = vmatprep.mubr.bf16.mxu0 0
    %149 = vmatmul.mubr.bf16.gmra.mrb[0].mxu0 %v110
    %v150 = vpop.f32.mrb[0].mxu0
    %v151 = vadd.f32 %v103, %v150
    %v152 = vpop.f32.mrb[0].mxu0
    %v153 = vpop.f32.mrb[0].mxu0
    %v154 = vpop.f32.mrb[0].mxu0
    %155 = vdwg.mxu0
    %v156 = vld [vmem:[%s4] sm:$0x1]
    %v158 = vlaneseq
    %v159 = vshrl.u32 %v158, 7
    %v160 = vsub.s32 0, %v159
    %v161 = vrot.slane %v156, %v160
    %v163 = vadd.f32 %v151, %v161
    %v164 = vmax.f32 %v163, 0.0
    %v165 = vpack.c.bf16 %v164, %v164
    %v166 = vld [vmem:[%s5] sm:$0xf]
    %v167 = vld [vmem:[%s5 + $0x4] sm:$0xf]
    %v168 = vld [vmem:[%s5 + $0x8] sm:$0xf]
    %v169 = vld [vmem:[%s5 + $0xc] sm:$0xf]
    %v170 = vld [vmem:[%s5 + $0x10] sm:$0xf]
    %v171 = vld [vmem:[%s5 + $0x14] sm:$0xf]
    %v172 = vld [vmem:[%s5 + $0x18] sm:$0xf]
    %v173 = vld [vmem:[%s5 + $0x1c] sm:$0xf]
    %v174 = vld [vmem:[%s5 + $0x20] sm:$0xf]
    %v175 = vld [vmem:[%s5 + $0x24] sm:$0xf]
    %v176 = vld [vmem:[%s5 + $0x28] sm:$0xf]
    %v177 = vld [vmem:[%s5 + $0x2c] sm:$0xf]
    %v178 = vld [vmem:[%s5 + $0x30] sm:$0xf]
    %v179 = vld [vmem:[%s5 + $0x34] sm:$0xf]
    %v180 = vld [vmem:[%s5 + $0x38] sm:$0xf]
    %v181 = vld [vmem:[%s5 + $0x3c] sm:$0xf]
    %v182 = vld [vmem:[%s6] sm:$0x1]
    %v184 = vlaneseq
    %v185 = vshrl.u32 %v184, 7
    %v186 = vsub.s32 0, %v185
    %v187 = vrot.slane %v182, %v186
    %v205 = vunpack.c.l.b16 %v166
    %v206 = vunpack.c.l.b16 %v167
    %v207 = vunpack.c.l.b16 %v168
    %v208 = vunpack.c.l.b16 %v169
    %v209 = vunpack.c.l.b16 %v170
    %v210 = vunpack.c.l.b16 %v171
    %v211 = vunpack.c.l.b16 %v172
    %v212 = vunpack.c.l.b16 %v173
    %v213 = vunpack.c.l.b16 %v174
    %v214 = vunpack.c.l.b16 %v175
    %v215 = vunpack.c.l.b16 %v176
    %v216 = vunpack.c.l.b16 %v177
    %v217 = vunpack.c.l.b16 %v178
    %v218 = vunpack.c.l.b16 %v179
    %v219 = vunpack.c.l.b16 %v180
    %v220 = vunpack.c.l.b16 %v181
    %v221 = vpack.c.b16 %v206, %v205
    %v222 = vpack.c.b16 %v208, %v207
    %v223 = vpack.c.b16 %v210, %v209
    %v224 = vpack.c.b16 %v212, %v211
    %v225 = vpack.c.b16 %v214, %v213
    %v226 = vpack.c.b16 %v216, %v215
    %v227 = vpack.c.b16 %v218, %v217
    %v228 = vpack.c.b16 %v220, %v219
    %237 = vmatprep.subr.bf16.mxu0 0
    %238 = vmatpush1.bf16.msra.mxu0 %v221
    %239 = vmatprep.subr.bf16.mxu0 0
    %240 = vmatpush1.bf16.msra.mxu0 %v222
    %241 = vmatprep.subr.bf16.mxu0 0
    %242 = vmatpush1.bf16.msra.mxu0 %v223
    %243 = vmatprep.subr.bf16.mxu0 0
    %244 = vmatpush1.bf16.msra.mxu0 %v224
    %245 = vmatprep.subr.bf16.mxu0 0
    %246 = vmatpush1.bf16.msra.mxu0 %v225
    %247 = vmatprep.subr.bf16.mxu0 0
    %248 = vmatpush1.bf16.msra.mxu0 %v226
    %249 = vmatprep.subr.bf16.mxu0 0
    %250 = vmatpush1.bf16.msra.mxu0 %v227
    %251 = vmatprep.subr.bf16.mxu0 0
    %252 = vmatpush1.bf16.msra.mxu0 %v228
    %253 = vmatprep.subr.bf16.mxu0 0
    %254 = vmatpush1.bf16.msra.mxu0 0
    %255 = vmatprep.subr.bf16.mxu0 0
    %256 = vmatpush1.bf16.msra.mxu0 0
    %257 = vmatprep.subr.bf16.mxu0 0
    %258 = vmatpush1.bf16.msra.mxu0 0
    %259 = vmatprep.subr.bf16.mxu0 0
    %260 = vmatpush1.bf16.msra.mxu0 0
    %261 = vmatprep.subr.bf16.mxu0 0
    %262 = vmatpush1.bf16.msra.mxu0 0
    %263 = vmatprep.subr.bf16.mxu0 0
    %264 = vmatpush1.bf16.msra.mxu0 0
    %265 = vmatprep.subr.bf16.mxu0 0
    %266 = vmatpush1.bf16.msra.mxu0 0
    %267 = vmatprep.subr.bf16.mxu0 0
    %268 = vmatpush1.bf16.msra.mxu0 0
    %269 = vmatprep.mubr.bf16.mxu0 0
    %270 = vmatmul.mubr.bf16.gmra.mrb[0].mxu0 %v165
    %v271 = vpop.f32.mrb[0].mxu0
    %v272 = vadd.f32 %v187, %v271
    %v273 = vpop.f32.mrb[0].mxu0
    %v274 = vpop.f32.mrb[0].mxu0
    %v275 = vpop.f32.mrb[0].mxu0
    %276 = vdwg.mxu0
    %v277 = vmax.f32 %v272, 0.0
    %v278 = vpack.c.bf16 %v277, %v277
    %v279 = vld [vmem:[#allocation2] sm:$0xf]
    %v280 = vld [vmem:[#allocation2 + $0x4] sm:$0xf]
    %v281 = vld [vmem:[#allocation2 + $0x8] sm:$0xf]
    %v282 = vld [vmem:[#allocation2 + $0xc] sm:$0xf]
    %v283 = vld [vmem:[#allocation2 + $0x10] sm:$0xf]
    %v284 = vld [vmem:[#allocation2 + $0x14] sm:$0xf]
    %v285 = vld [vmem:[#allocation2 + $0x18] sm:$0xf]
    %v286 = vld [vmem:[#allocation2 + $0x1c] sm:$0xf]
    %v287 = vld [vmem:[#allocation2 + $0x20] sm:$0xf]
    %v288 = vld [vmem:[#allocation2 + $0x24] sm:$0xf]
    %v289 = vld [vmem:[#allocation2 + $0x28] sm:$0xf]
    %v290 = vld [vmem:[#allocation2 + $0x2c] sm:$0xf]
    %v291 = vld [vmem:[#allocation2 + $0x30] sm:$0xf]
    %v292 = vld [vmem:[#allocation2 + $0x34] sm:$0xf]
    %v293 = vld [vmem:[#allocation2 + $0x38] sm:$0xf]
    %v294 = vld [vmem:[#allocation2 + $0x3c] sm:$0xf]
    %v295 = vld [vmem:[%s8] sm:$0x1]
    %v297 = vlaneseq
    %v298 = vshrl.u32 %v297, 7
    %v299 = vsub.s32 0, %v298
    %v300 = vrot.slane %v295, %v299
    %v318 = vunpack.c.l.b16 %v279
    %v319 = vunpack.c.l.b16 %v280
    %v320 = vunpack.c.l.b16 %v281
    %v321 = vunpack.c.l.b16 %v282
    %v322 = vunpack.c.l.b16 %v283
    %v323 = vunpack.c.l.b16 %v284
    %v324 = vunpack.c.l.b16 %v285
    %v325 = vunpack.c.l.b16 %v286
    %v326 = vunpack.c.l.b16 %v287
    %v327 = vunpack.c.l.b16 %v288
    %v328 = vunpack.c.l.b16 %v289
    %v329 = vunpack.c.l.b16 %v290
    %v330 = vunpack.c.l.b16 %v291
    %v331 = vunpack.c.l.b16 %v292
    %v332 = vunpack.c.l.b16 %v293
    %v333 = vunpack.c.l.b16 %v294
    %v334 = vpack.c.b16 %v319, %v318
    %v335 = vpack.c.b16 %v321, %v320
    %v336 = vpack.c.b16 %v323, %v322
    %v337 = vpack.c.b16 %v325, %v324
    %v338 = vpack.c.b16 %v327, %v326
    %v339 = vpack.c.b16 %v329, %v328
    %v340 = vpack.c.b16 %v331, %v330
    %v341 = vpack.c.b16 %v333, %v332
    %350 = vmatprep.subr.bf16.mxu0 0
    %351 = vmatpush1.bf16.msra.mxu0 %v334
    %352 = vmatprep.subr.bf16.mxu0 0
    %353 = vmatpush1.bf16.msra.mxu0 %v335
    %354 = vmatprep.subr.bf16.mxu0 0
    %355 = vmatpush1.bf16.msra.mxu0 %v336
    %356 = vmatprep.subr.bf16.mxu0 0
    %357 = vmatpush1.bf16.msra.mxu0 %v337
    %358 = vmatprep.subr.bf16.mxu0 0
    %359 = vmatpush1.bf16.msra.mxu0 %v338
    %360 = vmatprep.subr.bf16.mxu0 0
    %361 = vmatpush1.bf16.msra.mxu0 %v339
    %362 = vmatprep.subr.bf16.mxu0 0
    %363 = vmatpush1.bf16.msra.mxu0 %v340
    %364 = vmatprep.subr.bf16.mxu0 0
    %365 = vmatpush1.bf16.msra.mxu0 %v341
    %366 = vmatprep.subr.bf16.mxu0 0
    %367 = vmatpush1.bf16.msra.mxu0 0
    %368 = vmatprep.subr.bf16.mxu0 0
    %369 = vmatpush1.bf16.msra.mxu0 0
    %370 = vmatprep.subr.bf16.mxu0 0
    %371 = vmatpush1.bf16.msra.mxu0 0
    %372 = vmatprep.subr.bf16.mxu0 0
    %373 = vmatpush1.bf16.msra.mxu0 0
    %374 = vmatprep.subr.bf16.mxu0 0
    %375 = vmatpush1.bf16.msra.mxu0 0
    %376 = vmatprep.subr.bf16.mxu0 0
    %377 = vmatpush1.bf16.msra.mxu0 0
    %378 = vmatprep.subr.bf16.mxu0 0
    %379 = vmatpush1.bf16.msra.mxu0 0
    %380 = vmatprep.subr.bf16.mxu0 0
    %381 = vmatpush1.bf16.msra.mxu0 0
    %382 = vmatprep.mubr.bf16.mxu0 0
    %383 = vmatmul.mubr.bf16.gmra.mrb[0].mxu0 %v278
    %v384 = vpop.f32.mrb[0].mxu0
    %v385 = vadd.f32 %v300, %v384
    %v386 = vpop.f32.mrb[0].mxu0
    %v387 = vpop.f32.mrb[0].mxu0
    %v388 = vpop.f32.mrb[0].mxu0
    %389 = vdwg.mxu0
    %v390 = vmax.f32 %v385, 0.0
    %v391 = vpack.c.bf16 %v390, %v390
    %v392 = vld [vmem:[%s9] sm:$0xf]
    %v393 = vld [vmem:[%s9 + $0x4] sm:$0xf]
    %v394 = vld [vmem:[%s9 + $0x8] sm:$0xf]
    %v395 = vld [vmem:[%s9 + $0xc] sm:$0xf]
    %v396 = vld [vmem:[%s9 + $0x10] sm:$0xf]
    %v397 = vld [vmem:[%s9 + $0x14] sm:$0xf]
    %v398 = vld [vmem:[%s9 + $0x18] sm:$0xf]
    %v399 = vld [vmem:[%s9 + $0x1c] sm:$0xf]
    %v400 = vld [vmem:[%s9 + $0x20] sm:$0xf]
    %v401 = vld [vmem:[%s9 + $0x24] sm:$0xf]
    %v402 = vld [vmem:[%s9 + $0x28] sm:$0xf]
    %v403 = vld [vmem:[%s9 + $0x2c] sm:$0xf]
    %v404 = vld [vmem:[%s9 + $0x30] sm:$0xf]
    %v405 = vld [vmem:[%s9 + $0x34] sm:$0xf]
    %v406 = vld [vmem:[%s9 + $0x38] sm:$0xf]
    %v407 = vld [vmem:[%s9 + $0x3c] sm:$0xf]
    %v408 = vld [vmem:[%s10] sm:$0x1]
    %v410 = vlaneseq
    %v411 = vshrl.u32 %v410, 7
    %v412 = vsub.s32 0, %v411
    %v413 = vrot.slane %v408, %v412
    %v431 = vunpack.c.l.b16 %v392
    %v432 = vunpack.c.l.b16 %v393
    %v433 = vunpack.c.l.b16 %v394
    %v434 = vunpack.c.l.b16 %v395
    %v435 = vunpack.c.l.b16 %v396
    %v436 = vunpack.c.l.b16 %v397
    %v437 = vunpack.c.l.b16 %v398
    %v438 = vunpack.c.l.b16 %v399
    %v439 = vunpack.c.l.b16 %v400
    %v440 = vunpack.c.l.b16 %v401
    %v441 = vunpack.c.l.b16 %v402
    %v442 = vunpack.c.l.b16 %v403
    %v443 = vunpack.c.l.b16 %v404
    %v444 = vunpack.c.l.b16 %v405
    %v445 = vunpack.c.l.b16 %v406
    %v446 = vunpack.c.l.b16 %v407
    %v447 = vpack.c.b16 %v432, %v431
    %v448 = vpack.c.b16 %v434, %v433
    %v449 = vpack.c.b16 %v436, %v435
    %v450 = vpack.c.b16 %v438, %v437
    %v451 = vpack.c.b16 %v440, %v439
    %v452 = vpack.c.b16 %v442, %v441
    %v453 = vpack.c.b16 %v444, %v443
    %v454 = vpack.c.b16 %v446, %v445
    %463 = vmatprep.subr.bf16.mxu0 0
    %464 = vmatpush1.bf16.msra.mxu0 %v447
    %465 = vmatprep.subr.bf16.mxu0 0
    %466 = vmatpush1.bf16.msra.mxu0 %v448
    %467 = vmatprep.subr.bf16.mxu0 0
    %468 = vmatpush1.bf16.msra.mxu0 %v449
    %469 = vmatprep.subr.bf16.mxu0 0
    %470 = vmatpush1.bf16.msra.mxu0 %v450
    %471 = vmatprep.subr.bf16.mxu0 0
    %472 = vmatpush1.bf16.msra.mxu0 %v451
    %473 = vmatprep.subr.bf16.mxu0 0
    %474 = vmatpush1.bf16.msra.mxu0 %v452
    %475 = vmatprep.subr.bf16.mxu0 0
    %476 = vmatpush1.bf16.msra.mxu0 %v453
    %477 = vmatprep.subr.bf16.mxu0 0
    %478 = vmatpush1.bf16.msra.mxu0 %v454
    %479 = vmatprep.subr.bf16.mxu0 0
    %480 = vmatpush1.bf16.msra.mxu0 0
    %481 = vmatprep.subr.bf16.mxu0 0
    %482 = vmatpush1.bf16.msra.mxu0 0
    %483 = vmatprep.subr.bf16.mxu0 0
    %484 = vmatpush1.bf16.msra.mxu0 0
    %485 = vmatprep.subr.bf16.mxu0 0
    %486 = vmatpush1.bf16.msra.mxu0 0
    %487 = vmatprep.subr.bf16.mxu0 0
    %488 = vmatpush1.bf16.msra.mxu0 0
    %489 = vmatprep.subr.bf16.mxu0 0
    %490 = vmatpush1.bf16.msra.mxu0 0
    %491 = vmatprep.subr.bf16.mxu0 0
    %492 = vmatpush1.bf16.msra.mxu0 0
    %493 = vmatprep.subr.bf16.mxu0 0
    %494 = vmatpush1.bf16.msra.mxu0 0
    %495 = vmatprep.mubr.bf16.mxu0 0
    %496 = vmatmul.mubr.bf16.gmra.mrb[0].mxu0 %v391
    %v497 = vpop.f32.mrb[0].mxu0
    %v498 = vadd.f32 %v413, %v497
    %v499 = vpop.f32.mrb[0].mxu0
    %v500 = vpop.f32.mrb[0].mxu0
    %v501 = vpop.f32.mrb[0].mxu0
    %502 = vdwg.mxu0
    %vm503 = vcmask 130048
    %504 = vst.msk [vmem:[#allocation5] sm:$0xff] %vm503, %v498
    // Predicated region
    $region50: #{tpu_custom_call.1} parent=1 // pred_check
      _
    $region51: #{tpu_custom_call.1} parent=1 // pred_check_branch
      %506 = sbr.rel (0) target = $region53
    $region52: #{tpu_custom_call.1} parent=1 // pred_region
      %s508 = ssub.s32 128, 128
      %509 = vsyncadd [#allocation4], %s508
      %s511 = sshll.u32 [#allocation5], 4
      %s512 = int_to_ptr.vmem [resolvable:$true] %s511
      %514 = dma.vmem_to_hbm [thread:$0]  %s512, 128, %s11, [#allocation4]
    $region53: #{tpu_custom_call.1} parent=1 // pred_fallthru
      _
    // Predicated region
    $region54: #{tpu_custom_call.1} parent=1 // pred_check
      _
    $region55: #{tpu_custom_call.1} parent=1 // pred_check_branch
      %516 = sbr.rel (0) target = $region57
    $region56: #{tpu_custom_call.1} parent=1 // pred_region
      %517 = dma.done [#allocation4], 128
    $region57: #{tpu_custom_call.1} parent=1 // pred_fallthru
      _
    %518 = vsyncpa [#allocation3], 1
    %519 = vsyncpa [#allocation4], 1

</llo_original>
